<compile_context>
chip_gen: v5e
topology: v5e:2x2
jax: 0.10.0
libtpu: 0.0.40
codegen_flags: <defaults>
</compile_context>

<pallas_src>
import functools

import jax
import jax.numpy as jnp
from jax.experimental import pallas as pl
from jax.experimental.pallas import tpu as pltpu


def mhsa_kernel(xf_ref, wq_ref, bq_ref, wk_ref, bk_ref, wv_ref, bv_ref,
                wfc_ref, bfc_ref, o_ref, k_sc, v_sc, *,
                num_heads, emb_size, q_tile, seq_len):
    """One grid step == one (batch element, query tile).

    xf_ref : (Npad, E) bf16  full (padded) sequence for this batch element
    wq_ref : (E, E)   bf16   Q projection weight
    bq_ref : (1, E)   f32    Q projection bias
    wk_ref : (E, E)   bf16   K projection weight    (bk_ref: (1, E) f32 bias)
    wv_ref : (E, E)   bf16   V projection weight    (bv_ref: (1, E) f32 bias)
    wfc_ref: (E, E)   bf16   output projection weight (bfc_ref: (1, E) f32 bias)
    o_ref  : (TQ, E)         output tokens for this (batch, query tile)
    k_sc   : (Npad, E) bf16  cached K for the current batch element
    v_sc   : (Npad, E) bf16  cached V for the current batch element
    """
    E = emb_size
    H = num_heads
    D = E // H
    TQ = q_tile
    n_pad = k_sc.shape[0]
    qi = pl.program_id(1)

    # ---- K/V projection: once per batch element (q tile 0), cached in VMEM ----
    @pl.when(qi == 0)
    def _():
        xf = xf_ref[...]                                               # (Npad, E) bf16
        k = jnp.dot(xf, wk_ref[...], preferred_element_type=jnp.float32) + bk_ref[...]
        v = jnp.dot(xf, wv_ref[...], preferred_element_type=jnp.float32) + bv_ref[...]
        k_sc[...] = k.astype(jnp.bfloat16)
        v_sc[...] = v.astype(jnp.bfloat16)

    # ---- Q projection for this query tile (sliced from the resident block) ----
    start = pl.multiple_of(qi * TQ, TQ)
    xq = xf_ref[pl.ds(start, TQ), :]                                   # (TQ, E) bf16
    q = jnp.dot(xq, wq_ref[...], preferred_element_type=jnp.float32) + bq_ref[...]
    # NOTE: the reference module scales by sqrt(emb_size), not sqrt(head_dim).
    # Fold the scale into q (TQ*E mults) instead of the (TQ, Npad) scores.
    q = (q * (1.0 / float(E) ** 0.5)).astype(jnp.bfloat16)             # (TQ, E)

    # Key-padding mask, only emitted when the sequence was padded (static check).
    if seq_len != n_pad:
        kmask = jax.lax.broadcasted_iota(jnp.int32, (1, n_pad), 1) < seq_len
    else:
        kmask = None

    # Per-head attention; each head's PV output is folded straight into the
    # final FC so no sub-128-lane scratch stores are ever issued.
    # TODO(synk): on v6e/v7x, batch the H heads into one 3-D dot_general
    # ((H,TQ,D) x (H,Npad,D)) to fill the 256-wide MXU once the required
    # 'b n (h d) -> b h n d' in-kernel relayout is validated; the unrolled
    # loop below keeps D-wide contractions per head.
    acc = jnp.zeros((TQ, E), dtype=jnp.float32)
    for h in range(H):  # H is small & static -> fully unrolled
        qh = q[:, h * D:(h + 1) * D]                                   # (TQ, D)
        kh = k_sc[:, h * D:(h + 1) * D]                                # (Npad, D) bf16
        vh = v_sc[:, h * D:(h + 1) * D]                                # (Npad, D) bf16

        # Scores: contraction over D expressed directly (no kh.T materialized).
        s = jax.lax.dot_general(qh, kh, (((1,), (1,)), ((), ())),
                                preferred_element_type=jnp.float32)    # (TQ, Npad)
        if kmask is not None:
            s = jnp.where(kmask, s, -1e30)

        # Softmax in f32; divide via approximate reciprocal (EUP slot).
        s = s - jnp.max(s, axis=-1, keepdims=True)
        p = jnp.exp(s)
        p = p * pl.reciprocal(jnp.sum(p, axis=-1, keepdims=True), approx=True)

        # P @ V (bf16 operands, f32 accumulation), then this head's slice of
        # the output projection accumulated into a full-width f32 value.
        pv = jnp.dot(p.astype(jnp.bfloat16), vh,
                     preferred_element_type=jnp.float32)               # (TQ, D)
        acc = acc + jnp.dot(pv.astype(jnp.bfloat16),
                            wfc_ref[h * D:(h + 1) * D, :],
                            preferred_element_type=jnp.float32)        # (TQ, E)

    o_ref[...] = (acc + bfc_ref[...]).astype(o_ref.dtype)


def multi_head_self_attention(x, wqkv, bqkv, wfc, bfc, *, num_heads):
    B, N, E = x.shape
    assert E % num_heads == 0
    out_dtype = x.dtype

    # Split fused QKV params host-side (free) so the kernel never slices
    # weights; store weights in HBM as bf16 (half the DMA, MXU-native).
    bqkv_f = jnp.asarray(bqkv, jnp.float32).reshape(3 * E)
    wq = jnp.asarray(wqkv[:, :E], jnp.bfloat16)                 # (E, E)
    wk = jnp.asarray(wqkv[:, E:2 * E], jnp.bfloat16)            # (E, E)
    wv = jnp.asarray(wqkv[:, 2 * E:], jnp.bfloat16)             # (E, E)
    bq = bqkv_f[:E].reshape(1, E)
    bk = bqkv_f[E:2 * E].reshape(1, E)
    bv = bqkv_f[2 * E:].reshape(1, E)
    wfc_bf = jnp.asarray(wfc, jnp.bfloat16)                     # (E, E)
    bfc_f = jnp.asarray(bfc, jnp.float32).reshape(1, E)

    # Query tile: 128 on all generations (fits v7x's 64 MiB budget, keeps the
    # pipeline deep); small/odd N (demo shapes, ViT's 197) is padded up to an
    # 8-aligned tile / a multiple of the tile and masked inside the kernel.
    if N >= 128:
        TQ = 128
    else:
        TQ = ((N + 7) // 8) * 8
    n_pad = ((N + TQ - 1) // TQ) * TQ
    n_q_tiles = n_pad // TQ

    # Cast x to bf16 host-side (kernel consumes bf16 anyway) and pad.
    x_bf = x.astype(jnp.bfloat16)
    if n_pad != N:
        x_bf = jnp.pad(x_bf, ((0, 0), (0, n_pad - N), (0, 0)))

    # Generation-safe VMEM budget: always pass the computed limit (v5e default
    # scoped limit is 16 MiB) and cap it at the actual device capacity.
    # NOTE: weight BlockSpecs are constant across the grid; we keep default
    # double-buffering (pl.Buffered(1) single-buffering is left out for
    # compile-safety across jax versions — only matters at E >= ~768 on v7x).
    need = (16 * E * E            # double-buffered bf16 weights
            + 64 * E              # double-buffered f32 biases
            + 4 * n_pad * E       # double-buffered bf16 x block
            + 8 * TQ * E          # double-buffered out block (f32)
            + 4 * n_pad * E       # bf16 K/V scratch
            + 8 * n_pad * E       # f32 K/V projection temporaries
            + 16 * TQ * n_pad     # per-head scores / probs
            + 16 * TQ * E)        # q / acc temporaries
    cap = 64 * 1024 * 1024        # conservative default (v7x physical VMEM)
    try:
        info = pltpu.get_tpu_info()
        cap = int(getattr(info, "vmem_capacity_bytes", cap) or cap)
    except Exception:
        pass
    vmem_limit = max(int(need * 1.3), 32 * 1024 * 1024)
    vmem_limit = min(vmem_limit, cap - 8 * 1024 * 1024)
    vmem_limit = max(vmem_limit, 16 * 1024 * 1024)

    # TODO(synk): for N >> 1-2K, add a KV-tile grid axis with online-softmax
    # (flash-style) accumulation instead of holding whole-sequence K/V + scores
    # in VMEM; unnecessary at ViT-scale N.

    kernel = functools.partial(mhsa_kernel, num_heads=num_heads, emb_size=E,
                               q_tile=TQ, seq_len=N)
    const = lambda b, q: (0, 0)

    out = pl.pallas_call(
        kernel,
        out_shape=jax.ShapeDtypeStruct((B, n_pad, E), out_dtype),
        grid_spec=pltpu.PrefetchScalarGridSpec(
            num_scalar_prefetch=0,
            grid=(B, n_q_tiles),
            in_specs=[
                pl.BlockSpec((None, n_pad, E), lambda b, q: (b, 0, 0)),  # x (bf16)
                pl.BlockSpec((E, E), const),                             # Wq
                pl.BlockSpec((1, E), const),                             # bq
                pl.BlockSpec((E, E), const),                             # Wk
                pl.BlockSpec((1, E), const),                             # bk
                pl.BlockSpec((E, E), const),                             # Wv
                pl.BlockSpec((1, E), const),                             # bv
                pl.BlockSpec((E, E), const),                             # Wfc
                pl.BlockSpec((1, E), const),                             # bfc
            ],
            out_specs=pl.BlockSpec((None, TQ, E), lambda b, q: (b, q, 0)),
            scratch_shapes=[
                pltpu.VMEM((n_pad, E), jnp.bfloat16),   # cached K
                pltpu.VMEM((n_pad, E), jnp.bfloat16),   # cached V
            ],
        ),
        compiler_params=pltpu.CompilerParams(
            # q axis carries the K/V scratch across iterations -> "arbitrary";
            # batch axis stays "parallel" for megacore sharding.
            dimension_semantics=("parallel", "arbitrary"),
            vmem_limit_bytes=vmem_limit),
    )(x_bf, wq, bq, wk, bk, wv, bv, wfc_bf, bfc_f)

    if n_pad != N:
        out = out[:, :N, :]
    return out


def mhsa_reference(x, wqkv, bqkv, wfc, bfc, num_heads):
    """Pure-JAX f32 reference matching the PyTorch module exactly."""
    B, N, E = x.shape
    D = E // num_heads
    qkv = x @ wqkv + bqkv.reshape(1, 1, 3 * E)                 # (B, N, 3E)
    q, k, v = jnp.split(qkv, 3, axis=-1)                       # each (B, N, E)

    def to_heads(t):  # 'b n (h d) -> b h n d'
        return t.reshape(B, N, num_heads, D).transpose(0, 2, 1, 3)

    q, k, v = map(to_heads, (q, k, v))
    attn = jnp.einsum('bhid,bhjd->bhij', q, k) / (E ** 0.5)
    attn = jax.nn.softmax(attn, axis=-1)
    out = jnp.einsum('bhij,bhjd->bhid', attn, v)
    out = out.transpose(0, 2, 1, 3).reshape(B, N, E)           # 'b h n d -> b n (h d)'
    return out @ wfc + bfc.reshape(1, 1, E)


if __name__ == "__main__":
    # Small shapes implied by the module: batch=2, seq=8, emb=32, heads=4.
    B, N, E, H = 2, 8, 32, 4

    key = jax.random.PRNGKey(0)
    kx, kw1, kb1, kw2, kb2 = jax.random.split(key, 5)

    x = jax.random.normal(kx, (B, N, E), dtype=jnp.float32)

    # Deterministic synthetic parameters (nn.Linear shapes, stored transposed).
    wqkv = jax.random.normal(kw1, (E, 3 * E), dtype=jnp.float32) * 0.05
    bqkv = jax.random.normal(kb1, (3 * E,), dtype=jnp.float32) * 0.01
    wfc = jax.random.normal(kw2, (E, E), dtype=jnp.float32) * 0.05
    bfc = jax.random.normal(kb2, (E,), dtype=jnp.float32) * 0.01

    y = multi_head_self_attention(x, wqkv, bqkv, wfc, bfc, num_heads=H)
    y = jax.block_until_ready(y)

    y_ref = mhsa_reference(x, wqkv, bqkv, wfc, bfc, num_heads=H)
    assert y.shape == (B, N, E)
    # bf16 matmul operands + approx reciprocal -> loosened tolerance vs f32 ref.
    assert jnp.allclose(y, y_ref, atol=2e-2, rtol=2e-2), "mismatch vs reference"

    print("KERNEL_OK")
</pallas_src>

<mosaic_0001>
module attributes {stable_mosaic.version = 11 : i64} {
  func.func @mhsa_kernel(%arg0: i32, %arg1: i32, %arg2: memref<1x8x32xbf16, #tpu.memory_space<vmem>>, %arg3: memref<32x32xbf16, #tpu.memory_space<vmem>>, %arg4: memref<1x32xf32, #tpu.memory_space<vmem>>, %arg5: memref<32x32xbf16, #tpu.memory_space<vmem>>, %arg6: memref<1x32xf32, #tpu.memory_space<vmem>>, %arg7: memref<32x32xbf16, #tpu.memory_space<vmem>>, %arg8: memref<1x32xf32, #tpu.memory_space<vmem>>, %arg9: memref<32x32xbf16, #tpu.memory_space<vmem>>, %arg10: memref<1x32xf32, #tpu.memory_space<vmem>>, %arg11: memref<1x8x32xf32, #tpu.memory_space<vmem>>, %arg12: memref<8x32xbf16, #tpu.memory_space<vmem>>, %arg13: memref<8x32xbf16, #tpu.memory_space<vmem>>) attributes {dimension_semantics = [#tpu.dimension_semantics<parallel>, #tpu.dimension_semantics<arbitrary>], iteration_bounds = array<i64: 2, 1>, scalar_prefetch = 0 : i64, scratch_operands = 2 : i64, tpu.core_type = #tpu.core_type<tc>, window_params = [{transform_indices = @transform_0, window_bounds = array<i64: 1, 8, 32>}, {pipeline_mode = #tpu.pipeline_mode<synchronous>, transform_indices = @transform_1, window_bounds = array<i64: 32, 32>}, {pipeline_mode = #tpu.pipeline_mode<synchronous>, transform_indices = @transform_2, window_bounds = array<i64: 1, 32>}, {pipeline_mode = #tpu.pipeline_mode<synchronous>, transform_indices = @transform_3, window_bounds = array<i64: 32, 32>}, {pipeline_mode = #tpu.pipeline_mode<synchronous>, transform_indices = @transform_4, window_bounds = array<i64: 1, 32>}, {pipeline_mode = #tpu.pipeline_mode<synchronous>, transform_indices = @transform_5, window_bounds = array<i64: 32, 32>}, {pipeline_mode = #tpu.pipeline_mode<synchronous>, transform_indices = @transform_6, window_bounds = array<i64: 1, 32>}, {pipeline_mode = #tpu.pipeline_mode<synchronous>, transform_indices = @transform_7, window_bounds = array<i64: 32, 32>}, {pipeline_mode = #tpu.pipeline_mode<synchronous>, transform_indices = @transform_8, window_bounds = array<i64: 1, 32>}, {transform_indices = @transform_9, window_bounds = array<i64: 1, 8, 32>}]} {
    %c0_i32 = arith.constant 0 : i32
    %0 = arith.cmpi eq, %arg1, %c0_i32 : i32
    %1 = arith.extui %0 : i1 to i32
    %c0_i32_0 = arith.constant 0 : i32
    %2 = arith.cmpi ne, %1, %c0_i32_0 : i32
    scf.if %2 {
      %c0_54 = arith.constant 0 : index
      %c0_55 = arith.constant 0 : index
      %c0_56 = arith.constant 0 : index
      %103 = vector.load %arg2[%c0_54, %c0_55, %c0_56] : memref<1x8x32xbf16, #tpu.memory_space<vmem>>, vector<1x8x32xbf16>
      %104 = vector.shape_cast %103 : vector<1x8x32xbf16> to vector<8x32xbf16>
      %c0_57 = arith.constant 0 : index
      %c0_58 = arith.constant 0 : index
      %105 = vector.load %arg5[%c0_57, %c0_58] : memref<32x32xbf16, #tpu.memory_space<vmem>>, vector<32x32xbf16>
      %cst_59 = arith.constant dense<0.000000e+00> : vector<8x32xf32>
      %106 = tpu.matmul %104, %105, %cst_59 {dimension_numbers = #tpu.dot_dimension_numbers<[1], [0], [0], [1], [0, 0, 1, 1], [], []>} : vector<8x32xbf16>, vector<32x32xbf16>, vector<8x32xf32> -> vector<8x32xf32>
      %c0_60 = arith.constant 0 : index
      %c0_61 = arith.constant 0 : index
      %107 = vector.load %arg6[%c0_60, %c0_61] : memref<1x32xf32, #tpu.memory_space<vmem>>, vector<1x32xf32>
      %108 = vector.broadcast %107 : vector<1x32xf32> to vector<8x32xf32>
      %109 = arith.addf %106, %108 : vector<8x32xf32>
      %c0_62 = arith.constant 0 : index
      %c0_63 = arith.constant 0 : index
      %110 = vector.load %arg7[%c0_62, %c0_63] : memref<32x32xbf16, #tpu.memory_space<vmem>>, vector<32x32xbf16>
      %cst_64 = arith.constant dense<0.000000e+00> : vector<8x32xf32>
      %111 = tpu.matmul %104, %110, %cst_64 {dimension_numbers = #tpu.dot_dimension_numbers<[1], [0], [0], [1], [0, 0, 1, 1], [], []>} : vector<8x32xbf16>, vector<32x32xbf16>, vector<8x32xf32> -> vector<8x32xf32>
      %c0_65 = arith.constant 0 : index
      %c0_66 = arith.constant 0 : index
      %112 = vector.load %arg8[%c0_65, %c0_66] : memref<1x32xf32, #tpu.memory_space<vmem>>, vector<1x32xf32>
      %113 = vector.broadcast %112 : vector<1x32xf32> to vector<8x32xf32>
      %114 = arith.addf %111, %113 : vector<8x32xf32>
      %115 = arith.truncf %109 : vector<8x32xf32> to vector<8x32xbf16>
      %c0_67 = arith.constant 0 : index
      %c0_68 = arith.constant 0 : index
      %116 = vector.load %arg12[%c0_67, %c0_68] : memref<8x32xbf16, #tpu.memory_space<vmem>>, vector<8x32xbf16>
      tpu.vector_store %arg12[%c0_67, %c0_68], %115 {strides = array<i32>} : memref<8x32xbf16, #tpu.memory_space<vmem>>, vector<8x32xbf16>,
      %117 = arith.truncf %114 : vector<8x32xf32> to vector<8x32xbf16>
      %c0_69 = arith.constant 0 : index
      %c0_70 = arith.constant 0 : index
      %118 = vector.load %arg13[%c0_69, %c0_70] : memref<8x32xbf16, #tpu.memory_space<vmem>>, vector<8x32xbf16>
      tpu.vector_store %arg13[%c0_69, %c0_70], %117 {strides = array<i32>} : memref<8x32xbf16, #tpu.memory_space<vmem>>, vector<8x32xbf16>,
    } else {
    }
    %c8_i32 = arith.constant 8 : i32
    %3 = arith.muli %arg1, %c8_i32 : i32
    %4 = tpu.assume_multiple %3, 8 : i32
    %c0 = arith.constant 0 : index
    %5 = arith.index_cast %4 : i32 to index
    %c0_1 = arith.constant 0 : index
    %6 = vector.load %arg2[%c0, %5, %c0_1] : memref<1x8x32xbf16, #tpu.memory_space<vmem>>, vector<1x8x32xbf16>
    %7 = vector.shape_cast %6 : vector<1x8x32xbf16> to vector<8x32xbf16>
    %c0_2 = arith.constant 0 : index
    %c0_3 = arith.constant 0 : index
    %8 = vector.load %arg3[%c0_2, %c0_3] : memref<32x32xbf16, #tpu.memory_space<vmem>>, vector<32x32xbf16>
    %cst = arith.constant dense<0.000000e+00> : vector<8x32xf32>
    %9 = tpu.matmul %7, %8, %cst {dimension_numbers = #tpu.dot_dimension_numbers<[1], [0], [0], [1], [0, 0, 1, 1], [], []>} : vector<8x32xbf16>, vector<32x32xbf16>, vector<8x32xf32> -> vector<8x32xf32>
    %c0_4 = arith.constant 0 : index
    %c0_5 = arith.constant 0 : index
    %10 = vector.load %arg4[%c0_4, %c0_5] : memref<1x32xf32, #tpu.memory_space<vmem>>, vector<1x32xf32>
    %11 = vector.broadcast %10 : vector<1x32xf32> to vector<8x32xf32>
    %12 = arith.addf %9, %11 : vector<8x32xf32>
    %cst_6 = arith.constant 0.176776692 : f32
    %13 = vector.broadcast %cst_6 : f32 to vector<8x32xf32>
    %14 = arith.mulf %12, %13 : vector<8x32xf32>
    %15 = arith.truncf %14 : vector<8x32xf32> to vector<8x32xbf16>
    %cst_7 = arith.constant 0.000000e+00 : f32
    %16 = vector.broadcast %cst_7 : f32 to vector<8x32xf32>
    %17 = vector.extract_strided_slice %15 {offsets = [0, 0], sizes = [8, 8], strides = [1, 1]} : vector<8x32xbf16> to vector<8x8xbf16>
    %c0_8 = arith.constant 0 : index
    %c0_9 = arith.constant 0 : index
    %18 = vector.load %arg12[%c0_8, %c0_9] : memref<8x32xbf16, #tpu.memory_space<vmem>>, vector<8x8xbf16>
    %c0_10 = arith.constant 0 : index
    %c0_11 = arith.constant 0 : index
    %19 = vector.load %arg13[%c0_10, %c0_11] : memref<8x32xbf16, #tpu.memory_space<vmem>>, vector<8x8xbf16>
    %cst_12 = arith.constant dense<0.000000e+00> : vector<8x8xf32>
    %20 = tpu.matmul %17, %18, %cst_12 {dimension_numbers = #tpu.dot_dimension_numbers<[1], [1], [0], [0], [0, 0, 1, 0], [], []>} : vector<8x8xbf16>, vector<8x8xbf16>, vector<8x8xf32> -> vector<8x8xf32>
    %cst_13 = arith.constant dense<0xFF800000> : vector<8xf32>
    %21 = vector.multi_reduction <maximumf>, %20, %cst_13 [1] : vector<8x8xf32> to vector<8xf32>
    %22 = vector.shape_cast %21 : vector<8xf32> to vector<8x1xf32>
    %23 = vector.broadcast %22 : vector<8x1xf32> to vector<8x8xf32>
    %24 = arith.subf %20, %23 : vector<8x8xf32>
    %25 = math.exp %24 : vector<8x8xf32>
    %cst_14 = arith.constant dense<0.000000e+00> : vector<8xf32>
    %26 = vector.multi_reduction <add>, %25, %cst_14 [1] : vector<8x8xf32> to vector<8xf32>
    %27 = vector.shape_cast %26 : vector<8xf32> to vector<8x1xf32>
    %28 = tpu.reciprocal %27 {approx = true} : vector<8x1xf32> -> vector<8x1xf32>
    %29 = vector.broadcast %28 : vector<8x1xf32> to vector<8x8xf32>
    %30 = arith.mulf %25, %29 : vector<8x8xf32>
    %31 = arith.truncf %30 : vector<8x8xf32> to vector<8x8xbf16>
    %cst_15 = arith.constant dense<0.000000e+00> : vector<8x8xf32>
    %32 = tpu.matmul %31, %19, %cst_15 {dimension_numbers = #tpu.dot_dimension_numbers<[1], [0], [0], [1], [0, 0, 1, 1], [], []>} : vector<8x8xbf16>, vector<8x8xbf16>, vector<8x8xf32> -> vector<8x8xf32>
    %33 = arith.truncf %32 : vector<8x8xf32> to vector<8x8xbf16>
    %c0_16 = arith.constant 0 : index
    %c0_17 = arith.constant 0 : index
    %34 = vector.load %arg9[%c0_16, %c0_17] : memref<32x32xbf16, #tpu.memory_space<vmem>>, vector<8x32xbf16>
    %cst_18 = arith.constant dense<0.000000e+00> : vector<8x32xf32>
    %35 = tpu.matmul %33, %34, %cst_18 {dimension_numbers = #tpu.dot_dimension_numbers<[1], [0], [0], [1], [0, 0, 1, 1], [], []>} : vector<8x8xbf16>, vector<8x32xbf16>, vector<8x32xf32> -> vector<8x32xf32>
    %36 = arith.addf %16, %35 : vector<8x32xf32>
    %37 = vector.extract_strided_slice %15 {offsets = [0, 8], sizes = [8, 8], strides = [1, 1]} : vector<8x32xbf16> to vector<8x8xbf16>
    %c0_19 = arith.constant 0 : index
    %c8 = arith.constant 8 : index
    %38 = vector.load %arg12[%c0_19, %c8] : memref<8x32xbf16, #tpu.memory_space<vmem>>, vector<8x8xbf16>
    %c0_20 = arith.constant 0 : index
    %c8_21 = arith.constant 8 : index
    %39 = vector.load %arg13[%c0_20, %c8_21] : memref<8x32xbf16, #tpu.memory_space<vmem>>, vector<8x8xbf16>
    %cst_22 = arith.constant dense<0.000000e+00> : vector<8x8xf32>
    %40 = tpu.matmul %37, %38, %cst_22 {dimension_numbers = #tpu.dot_dimension_numbers<[1], [1], [0], [0], [0, 0, 1, 0], [], []>} : vector<8x8xbf16>, vector<8x8xbf16>, vector<8x8xf32> -> vector<8x8xf32>
    %cst_23 = arith.constant dense<0xFF800000> : vector<8xf32>
    %41 = vector.multi_reduction <maximumf>, %40, %cst_23 [1] : vector<8x8xf32> to vector<8xf32>
    %42 = vector.shape_cast %41 : vector<8xf32> to vector<8x1xf32>
    %43 = vector.broadcast %42 : vector<8x1xf32> to vector<8x8xf32>
    %44 = arith.subf %40, %43 : vector<8x8xf32>
    %45 = math.exp %44 : vector<8x8xf32>
    %cst_24 = arith.constant dense<0.000000e+00> : vector<8xf32>
    %46 = vector.multi_reduction <add>, %45, %cst_24 [1] : vector<8x8xf32> to vector<8xf32>
    %47 = vector.shape_cast %46 : vector<8xf32> to vector<8x1xf32>
    %48 = tpu.reciprocal %47 {approx = true} : vector<8x1xf32> -> vector<8x1xf32>
    %49 = vector.broadcast %48 : vector<8x1xf32> to vector<8x8xf32>
    %50 = arith.mulf %45, %49 : vector<8x8xf32>
    %51 = arith.truncf %50 : vector<8x8xf32> to vector<8x8xbf16>
    %cst_25 = arith.constant dense<0.000000e+00> : vector<8x8xf32>
    %52 = tpu.matmul %51, %39, %cst_25 {dimension_numbers = #tpu.dot_dimension_numbers<[1], [0], [0], [1], [0, 0, 1, 1], [], []>} : vector<8x8xbf16>, vector<8x8xbf16>, vector<8x8xf32> -> vector<8x8xf32>
    %53 = arith.truncf %52 : vector<8x8xf32> to vector<8x8xbf16>
    %c8_26 = arith.constant 8 : index
    %c0_27 = arith.constant 0 : index
    %54 = vector.load %arg9[%c8_26, %c0_27] : memref<32x32xbf16, #tpu.memory_space<vmem>>, vector<8x32xbf16>
    %cst_28 = arith.constant dense<0.000000e+00> : vector<8x32xf32>
    %55 = tpu.matmul %53, %54, %cst_28 {dimension_numbers = #tpu.dot_dimension_numbers<[1], [0], [0], [1], [0, 0, 1, 1], [], []>} : vector<8x8xbf16>, vector<8x32xbf16>, vector<8x32xf32> -> vector<8x32xf32>
    %56 = arith.addf %36, %55 : vector<8x32xf32>
    %57 = vector.extract_strided_slice %15 {offsets = [0, 16], sizes = [8, 8], strides = [1, 1]} : vector<8x32xbf16> to vector<8x8xbf16>
    %c0_29 = arith.constant 0 : index
    %c16 = arith.constant 16 : index
    %58 = vector.load %arg12[%c0_29, %c16] : memref<8x32xbf16, #tpu.memory_space<vmem>>, vector<8x8xbf16>
    %c0_30 = arith.constant 0 : index
    %c16_31 = arith.constant 16 : index
    %59 = vector.load %arg13[%c0_30, %c16_31] : memref<8x32xbf16, #tpu.memory_space<vmem>>, vector<8x8xbf16>
    %cst_32 = arith.constant dense<0.000000e+00> : vector<8x8xf32>
    %60 = tpu.matmul %57, %58, %cst_32 {dimension_numbers = #tpu.dot_dimension_numbers<[1], [1], [0], [0], [0, 0, 1, 0], [], []>} : vector<8x8xbf16>, vector<8x8xbf16>, vector<8x8xf32> -> vector<8x8xf32>
    %cst_33 = arith.constant dense<0xFF800000> : vector<8xf32>
    %61 = vector.multi_reduction <maximumf>, %60, %cst_33 [1] : vector<8x8xf32> to vector<8xf32>
    %62 = vector.shape_cast %61 : vector<8xf32> to vector<8x1xf32>
    %63 = vector.broadcast %62 : vector<8x1xf32> to vector<8x8xf32>
    %64 = arith.subf %60, %63 : vector<8x8xf32>
    %65 = math.exp %64 : vector<8x8xf32>
    %cst_34 = arith.constant dense<0.000000e+00> : vector<8xf32>
    %66 = vector.multi_reduction <add>, %65, %cst_34 [1] : vector<8x8xf32> to vector<8xf32>
    %67 = vector.shape_cast %66 : vector<8xf32> to vector<8x1xf32>
    %68 = tpu.reciprocal %67 {approx = true} : vector<8x1xf32> -> vector<8x1xf32>
    %69 = vector.broadcast %68 : vector<8x1xf32> to vector<8x8xf32>
    %70 = arith.mulf %65, %69 : vector<8x8xf32>
    %71 = arith.truncf %70 : vector<8x8xf32> to vector<8x8xbf16>
    %cst_35 = arith.constant dense<0.000000e+00> : vector<8x8xf32>
    %72 = tpu.matmul %71, %59, %cst_35 {dimension_numbers = #tpu.dot_dimension_numbers<[1], [0], [0], [1], [0, 0, 1, 1], [], []>} : vector<8x8xbf16>, vector<8x8xbf16>, vector<8x8xf32> -> vector<8x8xf32>
    %73 = arith.truncf %72 : vector<8x8xf32> to vector<8x8xbf16>
    %c16_36 = arith.constant 16 : index
    %c0_37 = arith.constant 0 : index
    %74 = vector.load %arg9[%c16_36, %c0_37] : memref<32x32xbf16, #tpu.memory_space<vmem>>, vector<8x32xbf16>
    %cst_38 = arith.constant dense<0.000000e+00> : vector<8x32xf32>
    %75 = tpu.matmul %73, %74, %cst_38 {dimension_numbers = #tpu.dot_dimension_numbers<[1], [0], [0], [1], [0, 0, 1, 1], [], []>} : vector<8x8xbf16>, vector<8x32xbf16>, vector<8x32xf32> -> vector<8x32xf32>
    %76 = arith.addf %56, %75 : vector<8x32xf32>
    %77 = vector.extract_strided_slice %15 {offsets = [0, 24], sizes = [8, 8], strides = [1, 1]} : vector<8x32xbf16> to vector<8x8xbf16>
    %c0_39 = arith.constant 0 : index
    %c24 = arith.constant 24 : index
    %78 = vector.load %arg12[%c0_39, %c24] : memref<8x32xbf16, #tpu.memory_space<vmem>>, vector<8x8xbf16>
    %c0_40 = arith.constant 0 : index
    %c24_41 = arith.constant 24 : index
    %79 = vector.load %arg13[%c0_40, %c24_41] : memref<8x32xbf16, #tpu.memory_space<vmem>>, vector<8x8xbf16>
    %cst_42 = arith.constant dense<0.000000e+00> : vector<8x8xf32>
    %80 = tpu.matmul %77, %78, %cst_42 {dimension_numbers = #tpu.dot_dimension_numbers<[1], [1], [0], [0], [0, 0, 1, 0], [], []>} : vector<8x8xbf16>, vector<8x8xbf16>, vector<8x8xf32> -> vector<8x8xf32>
    %cst_43 = arith.constant dense<0xFF800000> : vector<8xf32>
    %81 = vector.multi_reduction <maximumf>, %80, %cst_43 [1] : vector<8x8xf32> to vector<8xf32>
    %82 = vector.shape_cast %81 : vector<8xf32> to vector<8x1xf32>
    %83 = vector.broadcast %82 : vector<8x1xf32> to vector<8x8xf32>
    %84 = arith.subf %80, %83 : vector<8x8xf32>
    %85 = math.exp %84 : vector<8x8xf32>
    %cst_44 = arith.constant dense<0.000000e+00> : vector<8xf32>
    %86 = vector.multi_reduction <add>, %85, %cst_44 [1] : vector<8x8xf32> to vector<8xf32>
    %87 = vector.shape_cast %86 : vector<8xf32> to vector<8x1xf32>
    %88 = tpu.reciprocal %87 {approx = true} : vector<8x1xf32> -> vector<8x1xf32>
    %89 = vector.broadcast %88 : vector<8x1xf32> to vector<8x8xf32>
    %90 = arith.mulf %85, %89 : vector<8x8xf32>
    %91 = arith.truncf %90 : vector<8x8xf32> to vector<8x8xbf16>
    %cst_45 = arith.constant dense<0.000000e+00> : vector<8x8xf32>
    %92 = tpu.matmul %91, %79, %cst_45 {dimension_numbers = #tpu.dot_dimension_numbers<[1], [0], [0], [1], [0, 0, 1, 1], [], []>} : vector<8x8xbf16>, vector<8x8xbf16>, vector<8x8xf32> -> vector<8x8xf32>
    %93 = arith.truncf %92 : vector<8x8xf32> to vector<8x8xbf16>
    %c24_46 = arith.constant 24 : index
    %c0_47 = arith.constant 0 : index
    %94 = vector.load %arg9[%c24_46, %c0_47] : memref<32x32xbf16, #tpu.memory_space<vmem>>, vector<8x32xbf16>
    %cst_48 = arith.constant dense<0.000000e+00> : vector<8x32xf32>
    %95 = tpu.matmul %93, %94, %cst_48 {dimension_numbers = #tpu.dot_dimension_numbers<[1], [0], [0], [1], [0, 0, 1, 1], [], []>} : vector<8x8xbf16>, vector<8x32xbf16>, vector<8x32xf32> -> vector<8x32xf32>
    %96 = arith.addf %76, %95 : vector<8x32xf32>
    %c0_49 = arith.constant 0 : index
    %c0_50 = arith.constant 0 : index
    %97 = vector.load %arg10[%c0_49, %c0_50] : memref<1x32xf32, #tpu.memory_space<vmem>>, vector<1x32xf32>
    %98 = vector.broadcast %97 : vector<1x32xf32> to vector<8x32xf32>
    %99 = arith.addf %96, %98 : vector<8x32xf32>
    %c0_51 = arith.constant 0 : index
    %c0_52 = arith.constant 0 : index
    %c0_53 = arith.constant 0 : index
    %100 = vector.load %arg11[%c0_51, %c0_52, %c0_53] : memref<1x8x32xf32, #tpu.memory_space<vmem>>, vector<1x8x32xf32>
    %101 = vector.shape_cast %100 : vector<1x8x32xf32> to vector<8x32xf32>
    %102 = vector.shape_cast %99 : vector<8x32xf32> to vector<1x8x32xf32>
    tpu.vector_store %arg11[%c0_51, %c0_52, %c0_53], %102 {strides = array<i32>} : memref<1x8x32xf32, #tpu.memory_space<vmem>>, vector<1x8x32xf32>,
    return
  }
  func.func @transform_0(%arg0: i32, %arg1: i32) -> (i32, i32, i32) {
    %c0_i32 = arith.constant 0 : i32
    %c0_i32_0 = arith.constant 0 : i32
    %c0_i32_1 = arith.constant 0 : i32
    return %arg0, %c0_i32, %c0_i32_0 : i32, i32, i32
  }
  func.func @transform_1(%arg0: i32, %arg1: i32) -> (i32, i32) {
    %c0_i32 = arith.constant 0 : i32
    %c0_i32_0 = arith.constant 0 : i32
    %c0_i32_1 = arith.constant 0 : i32
    return %c0_i32, %c0_i32_0 : i32, i32
  }
  func.func @transform_2(%arg0: i32, %arg1: i32) -> (i32, i32) {
    %c0_i32 = arith.constant 0 : i32
    %c0_i32_0 = arith.constant 0 : i32
    %c0_i32_1 = arith.constant 0 : i32
    return %c0_i32, %c0_i32_0 : i32, i32
  }
  func.func @transform_3(%arg0: i32, %arg1: i32) -> (i32, i32) {
    %c0_i32 = arith.constant 0 : i32
    %c0_i32_0 = arith.constant 0 : i32
    %c0_i32_1 = arith.constant 0 : i32
    return %c0_i32, %c0_i32_0 : i32, i32
  }
  func.func @transform_4(%arg0: i32, %arg1: i32) -> (i32, i32) {
    %c0_i32 = arith.constant 0 : i32
    %c0_i32_0 = arith.constant 0 : i32
    %c0_i32_1 = arith.constant 0 : i32
    return %c0_i32, %c0_i32_0 : i32, i32
  }
  func.func @transform_5(%arg0: i32, %arg1: i32) -> (i32, i32) {
    %c0_i32 = arith.constant 0 : i32
    %c0_i32_0 = arith.constant 0 : i32
    %c0_i32_1 = arith.constant 0 : i32
    return %c0_i32, %c0_i32_0 : i32, i32
  }
  func.func @transform_6(%arg0: i32, %arg1: i32) -> (i32, i32) {
    %c0_i32 = arith.constant 0 : i32
    %c0_i32_0 = arith.constant 0 : i32
    %c0_i32_1 = arith.constant 0 : i32
    return %c0_i32, %c0_i32_0 : i32, i32
  }
  func.func @transform_7(%arg0: i32, %arg1: i32) -> (i32, i32) {
    %c0_i32 = arith.constant 0 : i32
    %c0_i32_0 = arith.constant 0 : i32
    %c0_i32_1 = arith.constant 0 : i32
    return %c0_i32, %c0_i32_0 : i32, i32
  }
  func.func @transform_8(%arg0: i32, %arg1: i32) -> (i32, i32) {
    %c0_i32 = arith.constant 0 : i32
    %c0_i32_0 = arith.constant 0 : i32
    %c0_i32_1 = arith.constant 0 : i32
    return %c0_i32, %c0_i32_0 : i32, i32
  }
  func.func @transform_9(%arg0: i32, %arg1: i32) -> (i32, i32, i32) {
    %c0_i32 = arith.constant 0 : i32
    %c0_i32_0 = arith.constant 0 : i32
    return %arg0, %arg1, %c0_i32 : i32, i32, i32
  }
}

</mosaic_0001>

<llo_original>
// kernel: tpu_custom_call.1
$region0: #{tpu_custom_call.1}
  #allocation0 [shape = 'u32[]', space=smem, size = 0x4, offset = 0x4, fixed_abs, tag = 'smem constant byte address 0x4 - core index']
  #allocation1 [shape = 'u32[72,128]{1,0:T(1,128)}', space=vmem, size = 0x9000, scoped, tag = 'internal scratch']
  #allocation2 [shape = 'bf16[8,32]{1,0:T(8,128)(2,1)}', space=vmem, size = 0x800, scoped, tag = 'scratch operand']
  #allocation3 [shape = 'bf16[8,32]{1,0:T(8,128)(2,1)}', space=vmem, size = 0x800, scoped, tag = 'scratch operand']
  %s0 = inlined_call_operand.hbm [shape: bf16[2,8,32], index: 0, kind: input, shape index: {}]
  %s1 = inlined_call_operand.hbm [shape: bf16[32,32], index: 1, kind: input, shape index: {}]
  %s2 = inlined_call_operand.vmem [shape: f32[1,32], index: 2, kind: input, shape index: {}]
  %s3 = inlined_call_operand.hbm [shape: bf16[32,32], index: 3, kind: input, shape index: {}]
  %s4 = inlined_call_operand.vmem [shape: f32[1,32], index: 4, kind: input, shape index: {}]
  %s5 = inlined_call_operand.hbm [shape: bf16[32,32], index: 5, kind: input, shape index: {}]
  %s6 = inlined_call_operand.vmem [shape: f32[1,32], index: 6, kind: input, shape index: {}]
  %s7 = inlined_call_operand.hbm [shape: bf16[32,32], index: 7, kind: input, shape index: {}]
  %s8 = inlined_call_operand.vmem [shape: f32[1,32], index: 8, kind: input, shape index: {}]
  %s9 = inlined_call_operand.hbm [shape: f32[2,8,32], index: 9, kind: output, shape index: {}]
  %s10 = sld [smem:[#allocation0]]
  $region93: #{tpu_custom_call.1} parent=0
    _
  %s12 = ssub.s32 1, %s10
  %s13 = scalar_select 0, %s12, %s10
  $region1: #{tpu_custom_call.1} parent=0
    #allocation4 [shape = 'u8[4096]{0}', space=vmem, size = 0x1000, scoped, tag = 'input window, operand 0']
    #allocation5 [shape = 's32[2]{0}', space=sflag, size = 0x8, scoped, tag = 'scoped memory for tpu_custom_call.1']
    #allocation6 [shape = 's32[2]{0}', space=sflag, size = 0x8, scoped, tag = 'scoped memory for tpu_custom_call.1']
    #allocation7 [shape = 'u8[8192]{0}', space=vmem, size = 0x2000, scoped, tag = 'input window, operand 1, single buffered']
    #allocation8 [shape = 's32[1]{0}', space=sflag, size = 0x4, scoped, tag = 'scoped memory for tpu_custom_call.1']
    #allocation9 [shape = 'u8[8192]{0}', space=vmem, size = 0x2000, scoped, tag = 'input window, operand 3, single buffered']
    #allocation10 [shape = 'u8[8192]{0}', space=vmem, size = 0x2000, scoped, tag = 'input window, operand 5, single buffered']
    #allocation11 [shape = 's32[1]{0}', space=sflag, size = 0x4, scoped, tag = 'scoped memory for tpu_custom_call.1']
    #allocation12 [shape = 'u8[8192]{0}', space=vmem, size = 0x2000, scoped, tag = 'input window, operand 7, single buffered']
    #allocation13 [shape = 'u8[8192]{0}', space=vmem, size = 0x2000, scoped, tag = 'output window, operand 0']
    %14 = vsyncpa [#allocation5], 0
    %s15 = scalar_lea.sflag [#allocation5], 1
    %16 = vsyncpa %s15, 0
    %17 = vsyncpa [#allocation8], 0
    %18 = vsyncpa [#allocation11], 0
    %19 = vsyncpa [#allocation6], 0
    %s20 = scalar_lea.sflag [#allocation6], 1
    %21 = vsyncpa %s20, 0
    loop: start=0, step=1, limit=4
    $region2: #{tpu_custom_call.1} parent=1 // loop_pre_header
      _
    $region3: #{tpu_custom_call.1} parent=1 // loop_header
      %s23 = sphi 0, %s27
      %p24 = scmp.ge.s32.totalorder %s23, 4
      %s30 = sphi 0, %s42
      %s31 = sphi 0, %s38
      %s32 = sphi 0, %s30
      %s33 = sphi 0, %s31
      %s34 = sphi 0, %s32
      %s35 = sphi 0, %s33
      %s45 = sphi 0, %s47
      %s48 = sphi 0, %s45
      %s49 = sphi 0, %s48
      %s65 = sphi 0, %s49
      %s69 = sphi 0, %s69
      %s71 = sphi 0, %s69
      %s72 = sphi 0, %s71
      %s86 = sphi 0, %s72
      %s90 = sphi 0, %s90
      %s92 = sphi 0, %s90
      %s93 = sphi 0, %s92
      %s107 = sphi 0, %s93
      %s111 = sphi 0, %s111
      %s113 = sphi 0, %s111
      %s114 = sphi 0, %s113
      %s128 = sphi 0, %s114
      %s132 = sphi 0, %s132
      %s134 = sphi 0, %s132
      %s135 = sphi 0, %s134
      %s149 = sphi 0, %s135
      %s153 = sphi 0, %s153
      %s155 = sphi 0, %s153
      %s156 = sphi 0, %s155
      %s170 = sphi 0, %s156
      %s174 = sphi 0, %s174
      %s176 = sphi 0, %s174
      %s177 = sphi 0, %s176
      %s191 = sphi 0, %s177
      %s195 = sphi 0, %s195
      %s197 = sphi 0, %s195
      %s198 = sphi 0, %s197
      %s212 = sphi 0, %s198
      %s216 = sphi 0, %s216
      %s218 = sphi 0, %s216
      %s219 = sphi 0, %s218
      %s233 = sphi 0, %s219
      %s241 = sphi 0, %s243
      %s244 = sphi 0, %s241
      %s245 = sphi 0, %s244
      %s261 = sphi 0, %s245
    $region4: #{tpu_custom_call.1} parent=1 // loop_header_branch
      %26 = sbr.rel (%p24) target = $region8
    $region5: #{tpu_custom_call.1} parent=1 // loop_body
      %s28 = ssub.s32 %s23, 1
      %s29 = ssub.s32 %s23, 2
      %s36 = sadd.s32 1, %s31
      %p37 = scmp.ge.s32.totalorder %s36, 1
      %s38 = scalar_select %p37, 0, %s36
      %s39 = sadd.s32 1, %s30
      %s40 = scalar_select %p37, %s39, %s30
      %p41 = scmp.ge.s32.totalorder %s40, 2
      %s42 = scalar_select %p41, 0, %s40
      %s43 = ssub.s32 %s30, %s42
      %p44 = scmp.eq.s32.totalorder %s43, 0
      %s46 = sadd.s32 %s45, 1
      %s47 = scalar_select %p44, %s45, %s46
      %p50 = pneg %p44
      %p51 = scmp.eq.s32.totalorder %s23, 1
      %p52 = por %p50, %p51
      %p53 = scmp.ne.s32.totalorder %s45, %s48
      %p54 = scmp.eq.s32.totalorder %s23, 0
      %p55 = por %p53, %p54
      %p56 = scmp.ne.s32.totalorder %s45, %s48
      %p57 = scmp.eq.s32.totalorder %s28, 1
      %p58 = por %p56, %p57
      %p59 = scmp.ne.s32.totalorder %s48, %s49
      %p60 = scmp.eq.s32.totalorder %s28, 0
      %p61 = por %p59, %p60
      %p62 = scmp.ne.s32.totalorder %s48, %s49
      %p63 = scmp.eq.s32.totalorder %s29, 1
      %p64 = por %p62, %p63
      %p66 = scmp.ne.s32.totalorder %s49, %s65
      %p67 = scmp.eq.s32.totalorder %s29, 0
      %p68 = por %p66, %p67
      %s70 = sadd.s32 %s69, 1
      %p73 = scmp.eq.s32.totalorder %s23, 1
      %p74 = scmp.ne.s32.totalorder %s69, %s71
      %p75 = scmp.eq.s32.totalorder %s23, 0
      %p76 = por %p74, %p75
      %p77 = scmp.ne.s32.totalorder %s69, %s71
      %p78 = scmp.eq.s32.totalorder %s28, 1
      %p79 = por %p77, %p78
      %p80 = scmp.ne.s32.totalorder %s71, %s72
      %p81 = scmp.eq.s32.totalorder %s28, 0
      %p82 = por %p80, %p81
      %p83 = scmp.ne.s32.totalorder %s71, %s72
      %p84 = scmp.eq.s32.totalorder %s29, 1
      %p85 = por %p83, %p84
      %p87 = scmp.ne.s32.totalorder %s72, %s86
      %p88 = scmp.eq.s32.totalorder %s29, 0
      %p89 = por %p87, %p88
      %s91 = sadd.s32 %s90, 1
      %p94 = scmp.eq.s32.totalorder %s23, 1
      %p95 = scmp.ne.s32.totalorder %s90, %s92
      %p96 = scmp.eq.s32.totalorder %s23, 0
      %p97 = por %p95, %p96
      %p98 = scmp.ne.s32.totalorder %s90, %s92
      %p99 = scmp.eq.s32.totalorder %s28, 1
      %p100 = por %p98, %p99
      %p101 = scmp.ne.s32.totalorder %s92, %s93
      %p102 = scmp.eq.s32.totalorder %s28, 0
      %p103 = por %p101, %p102
      %p104 = scmp.ne.s32.totalorder %s92, %s93
      %p105 = scmp.eq.s32.totalorder %s29, 1
      %p106 = por %p104, %p105
      %p108 = scmp.ne.s32.totalorder %s93, %s107
      %p109 = scmp.eq.s32.totalorder %s29, 0
      %p110 = por %p108, %p109
      %s112 = sadd.s32 %s111, 1
      %p115 = scmp.eq.s32.totalorder %s23, 1
      %p116 = scmp.ne.s32.totalorder %s111, %s113
      %p117 = scmp.eq.s32.totalorder %s23, 0
      %p118 = por %p116, %p117
      %p119 = scmp.ne.s32.totalorder %s111, %s113
      %p120 = scmp.eq.s32.totalorder %s28, 1
      %p121 = por %p119, %p120
      %p122 = scmp.ne.s32.totalorder %s113, %s114
      %p123 = scmp.eq.s32.totalorder %s28, 0
      %p124 = por %p122, %p123
      %p125 = scmp.ne.s32.totalorder %s113, %s114
      %p126 = scmp.eq.s32.totalorder %s29, 1
      %p127 = por %p125, %p126
      %p129 = scmp.ne.s32.totalorder %s114, %s128
      %p130 = scmp.eq.s32.totalorder %s29, 0
      %p131 = por %p129, %p130
      %s133 = sadd.s32 %s132, 1
      %p136 = scmp.eq.s32.totalorder %s23, 1
      %p137 = scmp.ne.s32.totalorder %s132, %s134
      %p138 = scmp.eq.s32.totalorder %s23, 0
      %p139 = por %p137, %p138
      %p140 = scmp.ne.s32.totalorder %s132, %s134
      %p141 = scmp.eq.s32.totalorder %s28, 1
      %p142 = por %p140, %p141
      %p143 = scmp.ne.s32.totalorder %s134, %s135
      %p144 = scmp.eq.s32.totalorder %s28, 0
      %p145 = por %p143, %p144
      %p146 = scmp.ne.s32.totalorder %s134, %s135
      %p147 = scmp.eq.s32.totalorder %s29, 1
      %p148 = por %p146, %p147
      %p150 = scmp.ne.s32.totalorder %s135, %s149
      %p151 = scmp.eq.s32.totalorder %s29, 0
      %p152 = por %p150, %p151
      %s154 = sadd.s32 %s153, 1
      %p157 = scmp.eq.s32.totalorder %s23, 1
      %p158 = scmp.ne.s32.totalorder %s153, %s155
      %p159 = scmp.eq.s32.totalorder %s23, 0
      %p160 = por %p158, %p159
      %p161 = scmp.ne.s32.totalorder %s153, %s155
      %p162 = scmp.eq.s32.totalorder %s28, 1
      %p163 = por %p161, %p162
      %p164 = scmp.ne.s32.totalorder %s155, %s156
      %p165 = scmp.eq.s32.totalorder %s28, 0
      %p166 = por %p164, %p165
      %p167 = scmp.ne.s32.totalorder %s155, %s156
      %p168 = scmp.eq.s32.totalorder %s29, 1
      %p169 = por %p167, %p168
      %p171 = scmp.ne.s32.totalorder %s156, %s170
      %p172 = scmp.eq.s32.totalorder %s29, 0
      %p173 = por %p171, %p172
      %s175 = sadd.s32 %s174, 1
      %p178 = scmp.eq.s32.totalorder %s23, 1
      %p179 = scmp.ne.s32.totalorder %s174, %s176
      %p180 = scmp.eq.s32.totalorder %s23, 0
      %p181 = por %p179, %p180
      %p182 = scmp.ne.s32.totalorder %s174, %s176
      %p183 = scmp.eq.s32.totalorder %s28, 1
      %p184 = por %p182, %p183
      %p185 = scmp.ne.s32.totalorder %s176, %s177
      %p186 = scmp.eq.s32.totalorder %s28, 0
      %p187 = por %p185, %p186
      %p188 = scmp.ne.s32.totalorder %s176, %s177
      %p189 = scmp.eq.s32.totalorder %s29, 1
      %p190 = por %p188, %p189
      %p192 = scmp.ne.s32.totalorder %s177, %s191
      %p193 = scmp.eq.s32.totalorder %s29, 0
      %p194 = por %p192, %p193
      %s196 = sadd.s32 %s195, 1
      %p199 = scmp.eq.s32.totalorder %s23, 1
      %p200 = scmp.ne.s32.totalorder %s195, %s197
      %p201 = scmp.eq.s32.totalorder %s23, 0
      %p202 = por %p200, %p201
      %p203 = scmp.ne.s32.totalorder %s195, %s197
      %p204 = scmp.eq.s32.totalorder %s28, 1
      %p205 = por %p203, %p204
      %p206 = scmp.ne.s32.totalorder %s197, %s198
      %p207 = scmp.eq.s32.totalorder %s28, 0
      %p208 = por %p206, %p207
      %p209 = scmp.ne.s32.totalorder %s197, %s198
      %p210 = scmp.eq.s32.totalorder %s29, 1
      %p211 = por %p209, %p210
      %p213 = scmp.ne.s32.totalorder %s198, %s212
      %p214 = scmp.eq.s32.totalorder %s29, 0
      %p215 = por %p213, %p214
      %s217 = sadd.s32 %s216, 1
      %p220 = scmp.eq.s32.totalorder %s23, 1
      %p221 = scmp.ne.s32.totalorder %s216, %s218
      %p222 = scmp.eq.s32.totalorder %s23, 0
      %p223 = por %p221, %p222
      %p224 = scmp.ne.s32.totalorder %s216, %s218
      %p225 = scmp.eq.s32.totalorder %s28, 1
      %p226 = por %p224, %p225
      %p227 = scmp.ne.s32.totalorder %s218, %s219
      %p228 = scmp.eq.s32.totalorder %s28, 0
      %p229 = por %p227, %p228
      %p230 = scmp.ne.s32.totalorder %s218, %s219
      %p231 = scmp.eq.s32.totalorder %s29, 1
      %p232 = por %p230, %p231
      %p234 = scmp.ne.s32.totalorder %s219, %s233
      %p235 = scmp.eq.s32.totalorder %s29, 0
      %p236 = por %p234, %p235
      %s237 = ssub.s32 %s30, %s42
      %s238 = ssub.s32 %s31, %s38
      %s239 = sor.u32 %s237, %s238
      %p240 = scmp.eq.s32.totalorder %s239, 0
      %s242 = sadd.s32 %s241, 1
      %s243 = scalar_select %p240, %s241, %s242
      %p246 = pneg %p240
      %p247 = scmp.eq.s32.totalorder %s23, 1
      %p248 = por %p246, %p247
      %p249 = scmp.ne.s32.totalorder %s241, %s244
      %p250 = scmp.eq.s32.totalorder %s23, 0
      %p251 = por %p249, %p250
      %p252 = scmp.ne.s32.totalorder %s241, %s244
      %p253 = scmp.eq.s32.totalorder %s28, 1
      %p254 = por %p252, %p253
      %p255 = scmp.ne.s32.totalorder %s244, %s245
      %p256 = scmp.eq.s32.totalorder %s28, 0
      %p257 = por %p255, %p256
      %p258 = scmp.ne.s32.totalorder %s244, %s245
      %p259 = scmp.eq.s32.totalorder %s29, 1
      %p260 = por %p258, %p259
      %p262 = scmp.ne.s32.totalorder %s245, %s261
      %p263 = scmp.eq.s32.totalorder %s29, 0
      %p264 = por %p262, %p263
      %p265 = scmp.le.s32.totalorder 1, %s23
      %p266 = scmp.lt.s32.totalorder %s23, 3
      %p267 = pnand %p265, %p266
      %p268 = pneg %p267
      // Predicated region
      $region9: #{tpu_custom_call.1} parent=5 // pred_check
        _
      $region10: #{tpu_custom_call.1} parent=5 // pred_check_branch
        %270 = sbr.rel (%p267) target = $region12
      $region11: #{tpu_custom_call.1} parent=5 // pred_region
        %s271 = ssub.s32 %s23, 1
        // Predicated region
        $region13: #{tpu_custom_call.1} parent=11 // pred_check
          %p272 = pneg %p82
        $region14: #{tpu_custom_call.1} parent=11 // pred_check_branch
          %274 = sbr.rel (%p272) target = $region16
        $region15: #{tpu_custom_call.1} parent=11 // pred_region
          %276 = vsyncadd [#allocation8], 0
          %s277 = sshll.u32 %s1, 4
          %s278 = int_to_ptr.hbm [resolvable:$true] %s277
          %s279 = sshll.u32 [#allocation7], 4
          %s280 = int_to_ptr.vmem [resolvable:$true] %s279
          %285 = dma.hbm_to_vmem [thread:$0]  %s278, 256, %s280, [#allocation8], 64, 64, 4
        $region16: #{tpu_custom_call.1} parent=11 // pred_fallthru
          _
        // Predicated region
        $region17: #{tpu_custom_call.1} parent=11 // pred_check
          %p286 = pneg %p103
        $region18: #{tpu_custom_call.1} parent=11 // pred_check_branch
          %288 = sbr.rel (%p286) target = $region20
        $region19: #{tpu_custom_call.1} parent=11 // pred_region
          _
        $region20: #{tpu_custom_call.1} parent=11 // pred_fallthru
          _
        // Predicated region
        $region21: #{tpu_custom_call.1} parent=11 // pred_check
          %p289 = pneg %p124
        $region22: #{tpu_custom_call.1} parent=11 // pred_check_branch
          %291 = sbr.rel (%p289) target = $region24
        $region23: #{tpu_custom_call.1} parent=11 // pred_region
          %293 = vsyncadd [#allocation8], 0
          %s294 = sshll.u32 %s3, 4
          %s295 = int_to_ptr.hbm [resolvable:$true] %s294
          %s296 = sshll.u32 [#allocation9], 4
          %s297 = int_to_ptr.vmem [resolvable:$true] %s296
          %302 = dma.hbm_to_vmem [thread:$0]  %s295, 256, %s297, [#allocation8], 64, 64, 4
        $region24: #{tpu_custom_call.1} parent=11 // pred_fallthru
          _
        // Predicated region
        $region25: #{tpu_custom_call.1} parent=11 // pred_check
          %p303 = pneg %p145
        $region26: #{tpu_custom_call.1} parent=11 // pred_check_branch
          %305 = sbr.rel (%p303) target = $region28
        $region27: #{tpu_custom_call.1} parent=11 // pred_region
          _
        $region28: #{tpu_custom_call.1} parent=11 // pred_fallthru
          _
        // Predicated region
        $region29: #{tpu_custom_call.1} parent=11 // pred_check
          %p306 = pneg %p166
        $region30: #{tpu_custom_call.1} parent=11 // pred_check_branch
          %308 = sbr.rel (%p306) target = $region32
        $region31: #{tpu_custom_call.1} parent=11 // pred_region
          %310 = vsyncadd [#allocation11], 0
          %s311 = sshll.u32 %s5, 4
          %s312 = int_to_ptr.hbm [resolvable:$true] %s311
          %s313 = sshll.u32 [#allocation10], 4
          %s314 = int_to_ptr.vmem [resolvable:$true] %s313
          %319 = dma.hbm_to_vmem [thread:$0]  %s312, 256, %s314, [#allocation11], 64, 64, 4
        $region32: #{tpu_custom_call.1} parent=11 // pred_fallthru
          _
        // Predicated region
        $region33: #{tpu_custom_call.1} parent=11 // pred_check
          %p320 = pneg %p187
        $region34: #{tpu_custom_call.1} parent=11 // pred_check_branch
          %322 = sbr.rel (%p320) target = $region36
        $region35: #{tpu_custom_call.1} parent=11 // pred_region
          _
        $region36: #{tpu_custom_call.1} parent=11 // pred_fallthru
          _
        // Predicated region
        $region37: #{tpu_custom_call.1} parent=11 // pred_check
          %p323 = pneg %p208
        $region38: #{tpu_custom_call.1} parent=11 // pred_check_branch
          %325 = sbr.rel (%p323) target = $region40
        $region39: #{tpu_custom_call.1} parent=11 // pred_region
          %327 = vsyncadd [#allocation11], 0
          %s328 = sshll.u32 %s7, 4
          %s329 = int_to_ptr.hbm [resolvable:$true] %s328
          %s330 = sshll.u32 [#allocation12], 4
          %s331 = int_to_ptr.vmem [resolvable:$true] %s330
          %336 = dma.hbm_to_vmem [thread:$0]  %s329, 256, %s331, [#allocation11], 64, 64, 4
        $region40: #{tpu_custom_call.1} parent=11 // pred_fallthru
          _
        // Predicated region
        $region41: #{tpu_custom_call.1} parent=11 // pred_check
          %p337 = pneg %p229
        $region42: #{tpu_custom_call.1} parent=11 // pred_check_branch
          %339 = sbr.rel (%p337) target = $region44
        $region43: #{tpu_custom_call.1} parent=11 // pred_region
          _
        $region44: #{tpu_custom_call.1} parent=11 // pred_fallthru
          _
      $region12: #{tpu_custom_call.1} parent=5 // pred_fallthru
        _
      %p340 = scmp.lt.s32.totalorder %s23, 2
      // Predicated region
      $region45: #{tpu_custom_call.1} parent=5 // pred_check
        %p341 = pneg %p340
      $region46: #{tpu_custom_call.1} parent=5 // pred_check_branch
        %343 = sbr.rel (%p341) target = $region48
      $region47: #{tpu_custom_call.1} parent=5 // pred_region
        // Predicated region
        $region49: #{tpu_custom_call.1} parent=47 // pred_check
          %p344 = pneg %p55
        $region50: #{tpu_custom_call.1} parent=47 // pred_check_branch
          %346 = sbr.rel (%p344) target = $region52
        $region51: #{tpu_custom_call.1} parent=47 // pred_region
          %s347 = sand.u32 %s45, 1
          %s348 = scalar_lea.sflag [#allocation5], %s347
          %s349 = sand.u32 %s45, 1
          %s350 = smul.addr %s349, 4
          %s351 = scalar_lea.vmem [#allocation4], %s350
          %353 = vsyncadd %s348, 0
          %s354 = smul.addr %s30, 4
          %s355 = scalar_lea.hbm %s0, %s354
          %s357 = sshll.u32 %s355, 4
          %s358 = int_to_ptr.hbm [resolvable:$true] %s357
          %s359 = sshll.u32 %s351, 4
          %s360 = int_to_ptr.vmem [resolvable:$true] %s359
          %362 = dma.hbm_to_vmem [thread:$0]  %s358, 64, %s360, %s348
        $region52: #{tpu_custom_call.1} parent=47 // pred_fallthru
          _
      $region48: #{tpu_custom_call.1} parent=5 // pred_fallthru
        _
      %p363 = scmp.le.s32.totalorder 1, %s23
      %p364 = scmp.lt.s32.totalorder %s23, 3
      %p365 = pnand %p363, %p364
      %p366 = pneg %p365
      // Predicated region
      $region53: #{tpu_custom_call.1} parent=5 // pred_check
        _
      $region54: #{tpu_custom_call.1} parent=5 // pred_check_branch
        %368 = sbr.rel (%p365) target = $region56
      $region55: #{tpu_custom_call.1} parent=5 // pred_region
        %s369 = ssub.s32 %s23, 1
        %s370 = sand.u32 %s48, 1
        %s371 = scalar_lea.sflag [#allocation5], %s370
        %s372 = sand.u32 %s48, 1
        %s373 = smul.addr %s372, 4
        %s374 = scalar_lea.vmem [#allocation4], %s373
        // Predicated region
        $region57: #{tpu_custom_call.1} parent=55 // pred_check
          %p375 = pneg %p61
        $region58: #{tpu_custom_call.1} parent=55 // pred_check_branch
          %377 = sbr.rel (%p375) target = $region60
        $region59: #{tpu_custom_call.1} parent=55 // pred_region
          %379 = dma.done %s371, 64
        $region60: #{tpu_custom_call.1} parent=55 // pred_fallthru
          _
        // Predicated region
        $region61: #{tpu_custom_call.1} parent=55 // pred_check
          %p380 = pneg %p82
        $region62: #{tpu_custom_call.1} parent=55 // pred_check_branch
          %382 = sbr.rel (%p380) target = $region64
        $region63: #{tpu_custom_call.1} parent=55 // pred_region
          %384 = dma.done [#allocation8], 256
        $region64: #{tpu_custom_call.1} parent=55 // pred_fallthru
          _
        // Predicated region
        $region65: #{tpu_custom_call.1} parent=55 // pred_check
          %p385 = pneg %p124
        $region66: #{tpu_custom_call.1} parent=55 // pred_check_branch
          %387 = sbr.rel (%p385) target = $region68
        $region67: #{tpu_custom_call.1} parent=55 // pred_region
          %389 = dma.done [#allocation8], 256
        $region68: #{tpu_custom_call.1} parent=55 // pred_fallthru
          _
        // Predicated region
        $region69: #{tpu_custom_call.1} parent=55 // pred_check
          %p390 = pneg %p166
        $region70: #{tpu_custom_call.1} parent=55 // pred_check_branch
          %392 = sbr.rel (%p390) target = $region72
        $region71: #{tpu_custom_call.1} parent=55 // pred_region
          %394 = dma.done [#allocation11], 256
        $region72: #{tpu_custom_call.1} parent=55 // pred_fallthru
          _
        // Predicated region
        $region73: #{tpu_custom_call.1} parent=55 // pred_check
          %p395 = pneg %p208
        $region74: #{tpu_custom_call.1} parent=55 // pred_check_branch
          %397 = sbr.rel (%p395) target = $region76
        $region75: #{tpu_custom_call.1} parent=55 // pred_region
          %399 = dma.done [#allocation11], 256
        $region76: #{tpu_custom_call.1} parent=55 // pred_fallthru
          _
        %s400 = sand.u32 %s48, 1
        %s401 = scalar_lea.sflag [#allocation5], %s400
        %s402 = sand.u32 %s48, 1
        %s403 = smul.addr %s402, 4
        %s404 = scalar_lea.vmem [#allocation4], %s403
        %p405 = pneg %p61
        %p406 = pneg %p58
        %p407 = pneg %p82
        %p408 = pneg %p79
        %p409 = pneg %p103
        %p410 = pneg %p100
        %p411 = pneg %p124
        %p412 = pneg %p121
        %p413 = pneg %p145
        %p414 = pneg %p142
        %p415 = pneg %p166
        %p416 = pneg %p163
        %p417 = pneg %p187
        %p418 = pneg %p184
        %p419 = pneg %p208
        %p420 = pneg %p205
        %p421 = pneg %p229
        %p422 = pneg %p226
        %p423 = pneg %p257
        %p424 = pneg %p254
        %s425 = sand.u32 %s244, 1
        %s426 = scalar_lea.sflag [#allocation6], %s425
        %s427 = sand.u32 %s244, 1
        %s428 = smul.addr %s427, 8
        %s429 = scalar_lea.vmem [#allocation13], %s428
        %p431 = scmp.eq.s32.totalorder %s33, 0
        // Predicated region
        $region77: #{tpu_custom_call.1} parent=55 // pred_check
          %p432 = pneg %p431
        $region78: #{tpu_custom_call.1} parent=55 // pred_check_branch
          %434 = sbr.rel (%p432) target = $region80
        $region79: #{tpu_custom_call.1} parent=55 // pred_region
          %v435 = vld [vmem:[%s374] sm:$0xf]
          %v436 = vld [vmem:[#allocation9] sm:$0xf]
          %v437 = vld [vmem:[#allocation9 + $0x4] sm:$0xf]
          %v438 = vld [vmem:[#allocation9 + $0x8] sm:$0xf]
          %v439 = vld [vmem:[#allocation9 + $0xc] sm:$0xf]
          %v440 = vld [vmem:[%s4] sm:$0x1]
          %v442 = vperm.slane %v440, 0
          %v448 = vunpack.c.l.b16 %v436
          %v449 = vunpack.c.l.b16 %v437
          %v450 = vunpack.c.l.b16 %v438
          %v451 = vunpack.c.l.b16 %v439
          %v452 = vpack.c.b16 %v449, %v448
          %v453 = vpack.c.b16 %v451, %v450
          %vm456 = vcmask 261120
          %v458 = vsel %vm456, %v435, 0
          %460 = vmatpush.bf16.msra.mxu0 0
          %461 = vmatpush.bf16.msra.mxu0 0
          %462 = vmatpush.bf16.msra.mxu0 0
          %463 = vmatpush.bf16.msra.mxu0 0
          %464 = vmatpush.bf16.msra.mxu0 0
          %465 = vmatpush.bf16.msra.mxu0 0
          %466 = vmatpush.bf16.msra.mxu0 %v453
          %467 = vmatpush.bf16.msra.mxu0 %v452
          %468 = vmatmul.bf16.gmra.mxu0 %v458
          %v469 = vpop.f32.mrf.mxu0
          %v470 = vadd.f32 %v442, %v469
          %v471 = vpop.f32.mrf.mxu0
          %472 = vdwg.mxu0
          %v473 = vld [vmem:[#allocation10] sm:$0xf]
          %v474 = vld [vmem:[#allocation10 + $0x4] sm:$0xf]
          %v475 = vld [vmem:[#allocation10 + $0x8] sm:$0xf]
          %v476 = vld [vmem:[#allocation10 + $0xc] sm:$0xf]
          %v477 = vld [vmem:[%s6] sm:$0x1]
          %v479 = vperm.slane %v477, 0
          %v485 = vunpack.c.l.b16 %v473
          %v486 = vunpack.c.l.b16 %v474
          %v487 = vunpack.c.l.b16 %v475
          %v488 = vunpack.c.l.b16 %v476
          %v489 = vpack.c.b16 %v486, %v485
          %v490 = vpack.c.b16 %v488, %v487
          %493 = vmatpush.bf16.msra.mxu0 0
          %494 = vmatpush.bf16.msra.mxu0 0
          %495 = vmatpush.bf16.msra.mxu0 0
          %496 = vmatpush.bf16.msra.mxu0 0
          %497 = vmatpush.bf16.msra.mxu0 0
          %498 = vmatpush.bf16.msra.mxu0 0
          %499 = vmatpush.bf16.msra.mxu0 %v490
          %500 = vmatpush.bf16.msra.mxu0 %v489
          %501 = vmatmul.bf16.gmra.mxu0 %v458
          %v502 = vpop.f32.mrf.mxu0
          %v503 = vadd.f32 %v479, %v502
          %v504 = vpop.f32.mrf.mxu0
          %505 = vdwg.mxu0
          %v506 = vpack.c.bf16 %v470, %v470
          %vm507 = vcmask 257024
          %508 = vst.msk [vmem:[#allocation2] sm:$0xf] %vm507, %v506
          %v509 = vpack.c.bf16 %v503, %v503
          %510 = vst.msk [vmem:[#allocation3] sm:$0xf] %vm507, %v509
        $region80: #{tpu_custom_call.1} parent=55 // pred_fallthru
          _
        %s511 = smul.u32 %s33, 8
        %s512 = sshra.s32 %s511, 3
        %s513 = sand.u32 %s511, 7
        %s514 = smul.addr %s512, 4
        %s515 = scalar_lea.vmem %s374, %s514 [#allocation4]
        %v516 = vld [vmem:[%s515] sm:$0xf]
        %v517 = vld [vmem:[#allocation7] sm:$0xf]
        %v518 = vld [vmem:[#allocation7 + $0x4] sm:$0xf]
        %v519 = vld [vmem:[#allocation7 + $0x8] sm:$0xf]
        %v520 = vld [vmem:[#allocation7 + $0xc] sm:$0xf]
        %v521 = vld [vmem:[%s2] sm:$0x1]
        %v523 = vperm.slane %v521, 0
        %v529 = vunpack.c.l.b16 %v517
        %v530 = vunpack.c.l.b16 %v518
        %v531 = vunpack.c.l.b16 %v519
        %v532 = vunpack.c.l.b16 %v520
        %v533 = vpack.c.b16 %v530, %v529
        %v534 = vpack.c.b16 %v532, %v531
        %vm537 = vcmask 261120
        %v539 = vsel %vm537, %v516, 0
        %541 = vmatpush.bf16.msra.mxu0 0
        %542 = vmatpush.bf16.msra.mxu0 0
        %543 = vmatpush.bf16.msra.mxu0 0
        %544 = vmatpush.bf16.msra.mxu0 0
        %545 = vmatpush.bf16.msra.mxu0 0
        %546 = vmatpush.bf16.msra.mxu0 0
        %547 = vmatpush.bf16.msra.mxu0 %v534
        %548 = vmatpush.bf16.msra.mxu0 %v533
        %549 = vmatmul.bf16.gmra.mxu0 %v539
        %v550 = vpop.f32.mrf.mxu0
        %v551 = vadd.f32 %v523, %v550
        %v552 = vpop.f32.mrf.mxu0
        %553 = vdwg.mxu0
        %v554 = vmul.f32 %v551, 0.17677669
        %v555 = vpack.c.bf16 %v554, %v554
        %v556 = vld [vmem:[#allocation2] sm:$0xf]
        %v557 = vld [vmem:[#allocation3] sm:$0xf]
        %vm558 = vcmask 64512
        %v560 = vsel %vm558, %v555, 0
        %v563 = vsel %vm558, %v556, 0
        %565 = vmatpush.bf16.xpose.msra.mxu0 0
        %566 = vmatpush.bf16.xpose.msra.mxu0 0
        %567 = vmatpush.bf16.xpose.msra.mxu0 0
        %568 = vmatpush.bf16.xpose.msra.mxu0 0
        %569 = vmatpush.bf16.xpose.msra.mxu0 0
        %570 = vmatpush.bf16.xpose.msra.mxu0 0
        %571 = vmatpush.bf16.xpose.msra.mxu0 0
        %572 = vmatpush.bf16.xpose.msra.mxu0 %v563
        %573 = vmatmul.bf16.gmra.mxu0 %v560
        %v574 = vpop.f32.mrf.mxu0
        %v575 = vadd.f32 0.0, %v574
        %v576 = vpop.f32.mrf.mxu0
        %577 = vdwg.mxu0
        %v578 = vsel %vm558, %v575, -inf
        %579 = vmax.xlane.f32.xlu0 %v578
        %v580 = vpop.xlane.xlu0 %579
        %v581 = vsub.f32 %v575, %v580
        %v582 = vmul.f32 %v581, 1.442695
        %v583 = vpow.pop %v582
        %v584 = vsel %vm558, %v583, 0.0
        %585 = vadd.xlane.f32.xlu0 %v584
        %v586 = vpop.xlane.xlu0 %585
        %v587 = vrcp.pop %v586
        %v588 = vmul.f32 %v583, %v587
        %v589 = vpack.c.bf16 %v588, %v588
        %v591 = vsel %vm558, %v589, 0
        %vm593 = vcmask 1043456
        %v595 = vsel %vm593, %v557, 0
        %597 = vmatpush.bf16.msra.mxu0 0
        %598 = vmatpush.bf16.msra.mxu0 0
        %599 = vmatpush.bf16.msra.mxu0 0
        %600 = vmatpush.bf16.msra.mxu0 0
        %601 = vmatpush.bf16.msra.mxu0 0
        %602 = vmatpush.bf16.msra.mxu0 0
        %603 = vmatpush.bf16.msra.mxu0 0
        %604 = vmatpush.bf16.msra.mxu0 %v595
        %605 = vmatmul.bf16.gmra.mxu0 %v591
        %v606 = vpop.f32.mrf.mxu0
        %v607 = vadd.f32 0.0, %v606
        %v608 = vpop.f32.mrf.mxu0
        %609 = vdwg.mxu0
        %v610 = vpack.c.bf16 %v607, %v607
        %v611 = vld [vmem:[#allocation12] sm:$0xf]
        %v613 = vunpack.c.l.b16 %v555
        %v614 = vpack.c.b16 %v613, %v613
        %615 = vrot.lane.b32.xlu0 %v614, 120
        %v616 = vpop.permute.xlu0 %615
        %v618 = vunpack.c.l.b16 %v556
        %v619 = vpack.c.b16 %v618, %v618
        %620 = vrot.lane.b32.xlu0 %v619, 120
        %v621 = vpop.permute.xlu0 %620
        %v623 = vsel %vm558, %v616, 0
        %v626 = vsel %vm558, %v621, 0
        %628 = vmatpush.bf16.xpose.msra.mxu0 0
        %629 = vmatpush.bf16.xpose.msra.mxu0 0
        %630 = vmatpush.bf16.xpose.msra.mxu0 0
        %631 = vmatpush.bf16.xpose.msra.mxu0 0
        %632 = vmatpush.bf16.xpose.msra.mxu0 0
        %633 = vmatpush.bf16.xpose.msra.mxu0 0
        %634 = vmatpush.bf16.xpose.msra.mxu0 0
        %635 = vmatpush.bf16.xpose.msra.mxu0 %v626
        %636 = vmatmul.bf16.gmra.mxu0 %v623
        %v637 = vpop.f32.mrf.mxu0
        %v638 = vadd.f32 0.0, %v637
        %v639 = vpop.f32.mrf.mxu0
        %640 = vdwg.mxu0
        %v641 = vsel %vm558, %v638, -inf
        %642 = vmax.xlane.f32.xlu0 %v641
        %v643 = vpop.xlane.xlu0 %642
        %v644 = vsub.f32 %v638, %v643
        %v645 = vmul.f32 %v644, 1.442695
        %v646 = vpow.pop %v645
        %v647 = vsel %vm558, %v646, 0.0
        %648 = vadd.xlane.f32.xlu0 %v647
        %v649 = vpop.xlane.xlu0 %648
        %v650 = vrcp.pop %v649
        %v651 = vmul.f32 %v646, %v650
        %v652 = vpack.c.bf16 %v651, %v651
        %v654 = vunpack.c.l.b16 %v557
        %v655 = vpack.c.b16 %v654, %v654
        %656 = vrot.lane.b32.xlu0 %v655, 120
        %v657 = vpop.permute.xlu0 %656
        %v659 = vsel %vm558, %v652, 0
        %v662 = vsel %vm593, %v657, 0
        %664 = vmatpush.bf16.msra.mxu0 0
        %665 = vmatpush.bf16.msra.mxu0 0
        %666 = vmatpush.bf16.msra.mxu0 0
        %667 = vmatpush.bf16.msra.mxu0 0
        %668 = vmatpush.bf16.msra.mxu0 0
        %669 = vmatpush.bf16.msra.mxu0 0
        %670 = vmatpush.bf16.msra.mxu0 0
        %671 = vmatpush.bf16.msra.mxu0 %v662
        %672 = vmatmul.bf16.gmra.mxu0 %v659
        %v673 = vpop.f32.mrf.mxu0
        %v674 = vadd.f32 0.0, %v673
        %v675 = vpop.f32.mrf.mxu0
        %676 = vdwg.mxu0
        %v677 = vpack.c.bf16 %v674, %v674
        %v678 = vld [vmem:[#allocation12 + $0x4] sm:$0xf]
        %v680 = vsel %vm558, %v677, 0
        %v683 = vsel %vm593, %v678, 0
        %685 = vmatpush.bf16.msra.mxu0 0
        %686 = vmatpush.bf16.msra.mxu0 0
        %687 = vmatpush.bf16.msra.mxu0 0
        %688 = vmatpush.bf16.msra.mxu0 0
        %689 = vmatpush.bf16.msra.mxu0 0
        %690 = vmatpush.bf16.msra.mxu0 0
        %691 = vmatpush.bf16.msra.mxu0 0
        %692 = vmatpush.bf16.msra.mxu0 %v683
        %693 = vmatmul.bf16.gmra.mxu0 %v680
        %v694 = vpop.f32.mrf.mxu0
        %v695 = vadd.f32 0.0, %v694
        %v696 = vpop.f32.mrf.mxu0
        %697 = vdwg.mxu0
        %v699 = vsel %vm558, %v610, 0
        %v702 = vsel %vm593, %v611, 0
        %704 = vmatpush.bf16.msra.mxu0 0
        %705 = vmatpush.bf16.msra.mxu0 0
        %706 = vmatpush.bf16.msra.mxu0 0
        %707 = vmatpush.bf16.msra.mxu0 0
        %708 = vmatpush.bf16.msra.mxu0 0
        %709 = vmatpush.bf16.msra.mxu0 0
        %710 = vmatpush.bf16.msra.mxu0 0
        %711 = vmatpush.bf16.msra.mxu0 %v702
        %712 = vmatmul.bf16.gmra.mxu0 %v699
        %v713 = vpop.f32.mrf.mxu0
        %v714 = vadd.f32 %v695, %v713
        %v715 = vpop.f32.mrf.mxu0
        %716 = vdwg.mxu0
        %717 = vrot.lane.b32.xlu0 %v614, 112
        %v718 = vpop.permute.xlu0 %717
        %719 = vrot.lane.b32.xlu0 %v619, 112
        %v720 = vpop.permute.xlu0 %719
        %v722 = vsel %vm558, %v718, 0
        %v725 = vsel %vm558, %v720, 0
        %727 = vmatpush.bf16.xpose.msra.mxu0 0
        %728 = vmatpush.bf16.xpose.msra.mxu0 0
        %729 = vmatpush.bf16.xpose.msra.mxu0 0
        %730 = vmatpush.bf16.xpose.msra.mxu0 0
        %731 = vmatpush.bf16.xpose.msra.mxu0 0
        %732 = vmatpush.bf16.xpose.msra.mxu0 0
        %733 = vmatpush.bf16.xpose.msra.mxu0 0
        %734 = vmatpush.bf16.xpose.msra.mxu0 %v725
        %735 = vmatmul.bf16.gmra.mxu0 %v722
        %v736 = vpop.f32.mrf.mxu0
        %v737 = vadd.f32 0.0, %v736
        %v738 = vpop.f32.mrf.mxu0
        %739 = vdwg.mxu0
        %v740 = vsel %vm558, %v737, -inf
        %741 = vmax.xlane.f32.xlu0 %v740
        %v742 = vpop.xlane.xlu0 %741
        %v743 = vsub.f32 %v737, %v742
        %v744 = vmul.f32 %v743, 1.442695
        %v745 = vpow.pop %v744
        %v746 = vsel %vm558, %v745, 0.0
        %747 = vadd.xlane.f32.xlu0 %v746
        %v748 = vpop.xlane.xlu0 %747
        %v749 = vrcp.pop %v748
        %v750 = vmul.f32 %v745, %v749
        %v751 = vpack.c.bf16 %v750, %v750
        %752 = vrot.lane.b32.xlu0 %v655, 112
        %v753 = vpop.permute.xlu0 %752
        %v755 = vsel %vm558, %v751, 0
        %v758 = vsel %vm593, %v753, 0
        %760 = vmatpush.bf16.msra.mxu0 0
        %761 = vmatpush.bf16.msra.mxu0 0
        %762 = vmatpush.bf16.msra.mxu0 0
        %763 = vmatpush.bf16.msra.mxu0 0
        %764 = vmatpush.bf16.msra.mxu0 0
        %765 = vmatpush.bf16.msra.mxu0 0
        %766 = vmatpush.bf16.msra.mxu0 0
        %767 = vmatpush.bf16.msra.mxu0 %v758
        %768 = vmatmul.bf16.gmra.mxu0 %v755
        %v769 = vpop.f32.mrf.mxu0
        %v770 = vadd.f32 0.0, %v769
        %v771 = vpop.f32.mrf.mxu0
        %772 = vdwg.mxu0
        %v773 = vpack.c.bf16 %v770, %v770
        %v774 = vld [vmem:[#allocation12 + $0x8] sm:$0xf]
        %v776 = vsel %vm558, %v773, 0
        %v779 = vsel %vm593, %v774, 0
        %781 = vmatpush.bf16.msra.mxu0 0
        %782 = vmatpush.bf16.msra.mxu0 0
        %783 = vmatpush.bf16.msra.mxu0 0
        %784 = vmatpush.bf16.msra.mxu0 0
        %785 = vmatpush.bf16.msra.mxu0 0
        %786 = vmatpush.bf16.msra.mxu0 0
        %787 = vmatpush.bf16.msra.mxu0 0
        %788 = vmatpush.bf16.msra.mxu0 %v779
        %789 = vmatmul.bf16.gmra.mxu0 %v776
        %v790 = vpop.f32.mrf.mxu0
        %v791 = vadd.f32 0.0, %v790
        %v792 = vpop.f32.mrf.mxu0
        %793 = vdwg.mxu0
        %v794 = vadd.f32 %v714, %v791
        %795 = vrot.lane.b32.xlu0 %v614, 104
        %v796 = vpop.permute.xlu0 %795
        %797 = vrot.lane.b32.xlu0 %v619, 104
        %v798 = vpop.permute.xlu0 %797
        %v800 = vsel %vm558, %v796, 0
        %v803 = vsel %vm558, %v798, 0
        %805 = vmatpush.bf16.xpose.msra.mxu0 0
        %806 = vmatpush.bf16.xpose.msra.mxu0 0
        %807 = vmatpush.bf16.xpose.msra.mxu0 0
        %808 = vmatpush.bf16.xpose.msra.mxu0 0
        %809 = vmatpush.bf16.xpose.msra.mxu0 0
        %810 = vmatpush.bf16.xpose.msra.mxu0 0
        %811 = vmatpush.bf16.xpose.msra.mxu0 0
        %812 = vmatpush.bf16.xpose.msra.mxu0 %v803
        %813 = vmatmul.bf16.gmra.mxu0 %v800
        %v814 = vpop.f32.mrf.mxu0
        %v815 = vadd.f32 0.0, %v814
        %v816 = vpop.f32.mrf.mxu0
        %817 = vdwg.mxu0
        %v818 = vsel %vm558, %v815, -inf
        %819 = vmax.xlane.f32.xlu0 %v818
        %v820 = vpop.xlane.xlu0 %819
        %v821 = vsub.f32 %v815, %v820
        %v822 = vmul.f32 %v821, 1.442695
        %v823 = vpow.pop %v822
        %v824 = vsel %vm558, %v823, 0.0
        %825 = vadd.xlane.f32.xlu0 %v824
        %v826 = vpop.xlane.xlu0 %825
        %v827 = vrcp.pop %v826
        %v828 = vmul.f32 %v823, %v827
        %v829 = vpack.c.bf16 %v828, %v828
        %830 = vrot.lane.b32.xlu0 %v655, 104
        %v831 = vpop.permute.xlu0 %830
        %v833 = vsel %vm558, %v829, 0
        %v836 = vsel %vm593, %v831, 0
        %838 = vmatpush.bf16.msra.mxu0 0
        %839 = vmatpush.bf16.msra.mxu0 0
        %840 = vmatpush.bf16.msra.mxu0 0
        %841 = vmatpush.bf16.msra.mxu0 0
        %842 = vmatpush.bf16.msra.mxu0 0
        %843 = vmatpush.bf16.msra.mxu0 0
        %844 = vmatpush.bf16.msra.mxu0 0
        %845 = vmatpush.bf16.msra.mxu0 %v836
        %846 = vmatmul.bf16.gmra.mxu0 %v833
        %v847 = vpop.f32.mrf.mxu0
        %v848 = vadd.f32 0.0, %v847
        %v849 = vpop.f32.mrf.mxu0
        %850 = vdwg.mxu0
        %v851 = vpack.c.bf16 %v848, %v848
        %v852 = vld [vmem:[#allocation12 + $0xc] sm:$0xf]
        %v854 = vsel %vm558, %v851, 0
        %v857 = vsel %vm593, %v852, 0
        %859 = vmatpush.bf16.msra.mxu0 0
        %860 = vmatpush.bf16.msra.mxu0 0
        %861 = vmatpush.bf16.msra.mxu0 0
        %862 = vmatpush.bf16.msra.mxu0 0
        %863 = vmatpush.bf16.msra.mxu0 0
        %864 = vmatpush.bf16.msra.mxu0 0
        %865 = vmatpush.bf16.msra.mxu0 0
        %866 = vmatpush.bf16.msra.mxu0 %v857
        %867 = vmatmul.bf16.gmra.mxu0 %v854
        %v868 = vpop.f32.mrf.mxu0
        %v869 = vadd.f32 0.0, %v868
        %v870 = vpop.f32.mrf.mxu0
        %871 = vdwg.mxu0
        %v872 = vadd.f32 %v794, %v869
        %v873 = vld [vmem:[%s8] sm:$0x1]
        %v875 = vperm.slane %v873, 0
        %v877 = vadd.f32 %v872, %v875
        %878 = vst.msk [vmem:[%s429] sm:$0xff] %vm537, %v877
        %s879 = sand.u32 %s244, 1
        %s880 = scalar_lea.sflag [#allocation6], %s879
        %s881 = sand.u32 %s244, 1
        %s882 = smul.addr %s881, 8
        %s883 = scalar_lea.vmem [#allocation13], %s882
        // Predicated region
        $region81: #{tpu_custom_call.1} parent=55 // pred_check
          %p884 = pneg %p254
        $region82: #{tpu_custom_call.1} parent=55 // pred_check_branch
          %886 = sbr.rel (%p884) target = $region84
        $region83: #{tpu_custom_call.1} parent=55 // pred_region
          %888 = vsyncadd %s880, 0
          %s889 = sadd.s32 %s33, %s32
          %s890 = smul.addr %s889, 8
          %s891 = scalar_lea.hbm %s9, %s890
          %s893 = sshll.u32 %s883, 4
          %s894 = int_to_ptr.vmem [resolvable:$true] %s893
          %s895 = sshll.u32 %s891, 4
          %s896 = int_to_ptr.hbm [resolvable:$true] %s895
          %898 = dma.vmem_to_hbm [thread:$0]  %s894, 128, %s896, %s880
        $region84: #{tpu_custom_call.1} parent=55 // pred_fallthru
          _
      $region56: #{tpu_custom_call.1} parent=5 // pred_fallthru
        _
      %p899 = scmp.le.s32.totalorder 2, %s23
      // Predicated region
      $region85: #{tpu_custom_call.1} parent=5 // pred_check
        %p900 = pneg %p899
      $region86: #{tpu_custom_call.1} parent=5 // pred_check_branch
        %902 = sbr.rel (%p900) target = $region88
      $region87: #{tpu_custom_call.1} parent=5 // pred_region
        %s903 = ssub.s32 %s23, 2
        // Predicated region
        $region89: #{tpu_custom_call.1} parent=87 // pred_check
          %p904 = pneg %p260
        $region90: #{tpu_custom_call.1} parent=87 // pred_check_branch
          %906 = sbr.rel (%p904) target = $region92
        $region91: #{tpu_custom_call.1} parent=87 // pred_region
          %s907 = sand.u32 %s245, 1
          %s908 = scalar_lea.sflag [#allocation6], %s907
          %s909 = sand.u32 %s245, 1
          %s910 = smul.addr %s909, 8
          %s911 = scalar_lea.vmem [#allocation13], %s910
          %913 = dma.done %s908, 128
        $region92: #{tpu_custom_call.1} parent=87 // pred_fallthru
          _
      $region88: #{tpu_custom_call.1} parent=5 // pred_fallthru
        _
    $region6: #{tpu_custom_call.1} parent=1 // loop_footer
      %s27 = sadd.s32 1, %s23
    $region7: #{tpu_custom_call.1} parent=1 // loop_footer_branch
      %22 = sbr.rel target = $region3
    $region8: #{tpu_custom_call.1} parent=1 // loop_exit
      _
    %914 = vsyncpa [#allocation5], 1
    %s915 = scalar_lea.sflag [#allocation5], 1
    %916 = vsyncpa %s915, 1
    %917 = vsyncpa [#allocation8], 1
    %918 = vsyncpa [#allocation11], 1
    %919 = vsyncpa [#allocation6], 1
    %s920 = scalar_lea.sflag [#allocation6], 1
    %921 = vsyncpa %s920, 1

</llo_original>
